<compile_context>
chip_gen: v6e
topology: v6e:2x2x1
jax: 0.10.0
libtpu: 0.0.40
codegen_flags: <defaults>
</compile_context>

<pallas_src>
import functools
import math

import jax
import jax.numpy as jnp
from jax import lax
from jax.experimental import pallas as pl
from jax.experimental.pallas import tpu as pltpu


def make_pe_table(d_model: int, max_len: int = 5000, dtype=jnp.float32):
    """Sinusoidal PE table, identical math to the PyTorch __init__ (even d_model)."""
    position = jnp.arange(max_len, dtype=jnp.float32)[:, None]              # (L, 1)
    div_term = jnp.exp(
        jnp.arange(0, d_model, 2, dtype=jnp.float32) * (-math.log(10000.0) / d_model)
    )                                                                       # (D/2,)
    pe = jnp.zeros((max_len, d_model), dtype=jnp.float32)
    pe = pe.at[:, 0::2].set(jnp.sin(position * div_term))
    pe = pe.at[:, 1::2].set(jnp.cos(position * div_term))
    return pe.astype(dtype)


def _mix32(x):
    """lowbias32 integer hash -- pure 32-bit VPU ops, portable to interpret mode."""
    x = x ^ (x >> jnp.uint32(16))
    x = x * jnp.uint32(0x7FEB352D)
    x = x ^ (x >> jnp.uint32(15))
    x = x * jnp.uint32(0x846CA68B)
    x = x ^ (x >> jnp.uint32(16))
    return x


def _pe_kernel(seed_ref, x_ref, pe_ref, o_ref, *, p: float, train: bool,
               n_cols_total: int):
    # x_ref: (ts, nb*D) VMEM tile, pe_ref: (ts, D) VMEM tile (already x's dtype),
    # seed_ref: (1,) SMEM scalar.
    ts, cols = x_ref.shape
    d = pe_ref.shape[1]
    nb = cols // d

    x = x_ref[...]
    pe = pe_ref[...]
    # Broadcast PE over the batch by lane-tiling the (ts, D) block nb times.
    y = x + (pe if nb == 1 else jnp.tile(pe, (1, nb)))

    if train and p > 0.0:
        # Counter-based dropout: hash(global element index, seed) -> keep mask.
        # Tile-size invariant and backend portable (no stateful TPU PRNG).
        # TODO(synk): cannot bit-match torch's RNG stream; semantics (keep prob
        # 1-p, scale 1/(1-p)) match nn.Dropout.
        row = lax.broadcasted_iota(jnp.int32, (ts, cols), 0).astype(jnp.uint32)
        col = lax.broadcasted_iota(jnp.int32, (ts, cols), 1).astype(jnp.uint32)
        row = row + (pl.program_id(0) * ts).astype(jnp.uint32)
        col = col + (pl.program_id(1) * cols).astype(jnp.uint32)
        idx = row * jnp.uint32(n_cols_total) + col            # global flat index (mod 2^32)
        salt = _mix32(seed_ref[0].astype(jnp.uint32))
        bits = _mix32(idx ^ salt)
        # keep prob = 1 - p (p ~ 1.0 saturates the threshold; negligible bias)
        thresh = jnp.uint32(min(int(p * (2 ** 32)), 2 ** 32 - 1))
        keep = bits >= thresh
        scale = jnp.asarray(1.0 / (1.0 - p), dtype=y.dtype)
        y = jnp.where(keep, y * scale, jnp.zeros_like(y))

    o_ref[...] = y.astype(o_ref.dtype)


def _default_budgets():
    """Per-generation tile / VMEM-limit sizing with headroom."""
    vmem_cap = 64 * 1024 * 1024                               # safe fallback (v7x-sized)
    try:
        info = pltpu.get_tpu_info()
        vmem_cap = int(getattr(info, "vmem_capacity_bytes", vmem_cap))
    except Exception:
        pass
    # ~25% headroom for compiler scratch / pe buffers; cap at 96 MiB.
    vmem_limit = max(32 * 1024 * 1024, min(int(vmem_cap * 0.75), 96 * 1024 * 1024))
    # Double-buffered x-in + out tiles dominate: footprint ~ 4 x tile_bytes.
    tile_bytes = max(1 << 20, int(vmem_limit * 0.65) // 4)
    return tile_bytes, vmem_limit


def positional_encoding(
    x,
    pe_table,
    *,
    p: float = 0.1,
    train: bool = False,
    seed: int = 0,
    tile_bytes: int | None = None,
    vmem_limit_bytes: int | None = None,
):
    """x: (S, B, D); pe_table: (max_len, D). Returns dropout(x + pe[:S])."""
    S, B, D = x.shape
    assert pe_table.shape[1] == D and pe_table.shape[0] >= S

    tb_def, vl_def = _default_budgets()
    tile_bytes = int(tile_bytes) if tile_bytes is not None else tb_def
    vmem_limit_bytes = int(vmem_limit_bytes) if vmem_limit_bytes is not None else vl_def

    # Pre-cast the PE table once in the wrapper (no per-element convert / f32 DMA).
    pe = pe_table if pe_table.dtype == x.dtype else pe_table.astype(x.dtype)

    # Lane-dense presentation: (S, B, D) -> (S, B*D), a free contiguous reshape.
    full_cols = B * D
    x2 = x.reshape(S, full_cols)

    itemsize = jnp.dtype(x.dtype).itemsize
    pack = max(8, 32 // itemsize)            # sublane pack: 8 f32, 16 bf16, 32 int8/fp8

    # Column tiling (in whole batches) only if a minimal pack-row tile of the full
    # width would blow the budget and D is lane-aligned so blocks stay 128-divisible.
    if D % 128 == 0 and full_cols * itemsize * pack > tile_bytes:
        nb = max(1, tile_bytes // (pack * D * itemsize))
        nb = min(nb, B)
    else:
        nb = B
    cols = nb * D

    # Row tile: as big as the budget allows, rounded to the sublane pack.
    rows = tile_bytes // max(1, cols * itemsize)
    rows = max(pack, (rows // pack) * pack)
    ts = min(rows, pl.cdiv(S, pack) * pack)

    grid = (pl.cdiv(S, ts), pl.cdiv(B, nb))

    seed_arr = jnp.asarray([seed], dtype=jnp.int32)
    kern = functools.partial(
        _pe_kernel, p=float(p), train=bool(train), n_cols_total=full_cols
    )

    out2 = pl.pallas_call(
        kern,
        out_shape=jax.ShapeDtypeStruct((S, full_cols), x.dtype),
        grid=grid,
        in_specs=[
            pl.BlockSpec(memory_space=pltpu.MemorySpace.SMEM),      # seed scalar
            pl.BlockSpec((ts, cols), lambda i, j: (i, j)),          # x tile (lane-dense)
            pl.BlockSpec((ts, D), lambda i, j: (i, 0)),             # pe rows (full table sliced)
        ],
        out_specs=pl.BlockSpec((ts, cols), lambda i, j: (i, j)),
        compiler_params=pltpu.CompilerParams(
            dimension_semantics=("parallel", "parallel"),
            vmem_limit_bytes=vmem_limit_bytes,
        ),
    )(seed_arr, x2, pe)
    # TODO(synk): x is NOT donated (no input_output_aliases); add it back only if
    # the caller jit-donates x, otherwise XLA's defensive copy costs more than it saves.
    return out2.reshape(S, B, D)


if __name__ == "__main__":
    # Small shapes consistent with the module's forward: (seq, batch, d_model).
    S, B, D = 8, 2, 32
    MAX_LEN = 64

    key = jax.random.PRNGKey(0)
    x = jax.random.normal(key, (S, B, D), dtype=jnp.float32)
    pe_table = make_pe_table(D, max_len=MAX_LEN, dtype=jnp.float32)

    # References computed up-front (kernel never aliases/donates its inputs).
    ref = x + pe_table[:S][:, None, :]

    # --- Eval mode (dropout = identity): exact check vs reference. ---
    out = jax.block_until_ready(positional_encoding(x, pe_table, p=0.1, train=False))
    assert out.shape == x.shape and out.dtype == x.dtype
    assert jnp.allclose(out, ref, atol=1e-6, rtol=1e-6)

    # --- Multi-tile grid path (tiny tile budget forces several grid steps). ---
    S2 = 48
    x2 = jax.random.normal(jax.random.PRNGKey(1), (S2, B, D), dtype=jnp.float32)
    ref2 = x2 + pe_table[:S2][:, None, :]
    out2 = jax.block_until_ready(
        positional_encoding(x2, pe_table, p=0.1, train=False, tile_bytes=1024)
    )
    assert jnp.allclose(out2, ref2, atol=1e-6, rtol=1e-6)

    # --- bf16 path: PE is pre-cast in the wrapper, add stays in bf16. ---
    x_bf = x.astype(jnp.bfloat16)
    ref_bf = x_bf + pe_table[:S].astype(jnp.bfloat16)[:, None, :]
    out_bf = jax.block_until_ready(positional_encoding(x_bf, pe_table, p=0.1, train=False))
    assert out_bf.dtype == jnp.bfloat16
    assert jnp.allclose(out_bf.astype(jnp.float32), ref_bf.astype(jnp.float32),
                        atol=2e-2, rtol=2e-2)

    # --- Train mode: inverted-dropout semantics (hash-PRNG mask). ---
    p = 0.5
    out_t = jax.block_until_ready(
        positional_encoding(x, pe_table, p=p, train=True, seed=1234)
    )
    kept = out_t != 0.0
    n_kept = int(jnp.sum(kept))
    assert 0.25 < n_kept / out_t.size < 0.75                 # roughly half kept
    assert jnp.allclose(out_t[kept], (ref / (1.0 - p))[kept], atol=1e-5, rtol=1e-5)

    print("KERNEL_OK")
</pallas_src>

<mosaic_0001>
module attributes {stable_mosaic.version = 11 : i64} {
  func.func @_pe_kernel(%arg0: i32, %arg1: i32, %arg2: memref<1xi32, #tpu.memory_space<smem>>, %arg3: memref<8x64xf32, #tpu.memory_space<vmem>>, %arg4: memref<8x32xf32, #tpu.memory_space<vmem>>, %arg5: memref<8x64xf32, #tpu.memory_space<vmem>>) attributes {dimension_semantics = [#tpu.dimension_semantics<parallel>, #tpu.dimension_semantics<parallel>], iteration_bounds = array<i64: 1, 1>, scalar_prefetch = 0 : i64, scratch_operands = 0 : i64, tpu.core_type = #tpu.core_type<tc>, window_params = [{transform_indices = @transform_0, window_bounds = array<i64: 1>}, {transform_indices = @transform_1, window_bounds = array<i64: 8, 64>}, {transform_indices = @transform_2, window_bounds = array<i64: 8, 32>}, {transform_indices = @transform_3, window_bounds = array<i64: 8, 64>}]} {
    %c0 = arith.constant 0 : index
    %c0_0 = arith.constant 0 : index
    %0 = vector.load %arg3[%c0, %c0_0] : memref<8x64xf32, #tpu.memory_space<vmem>>, vector<8x64xf32>
    %c0_1 = arith.constant 0 : index
    %c0_2 = arith.constant 0 : index
    %1 = vector.load %arg4[%c0_1, %c0_2] : memref<8x32xf32, #tpu.memory_space<vmem>>, vector<8x32xf32>
    %2 = tpu.concatenate %1, %1 in 1 : vector<8x32xf32>, vector<8x32xf32> -> vector<8x64xf32>
    %3 = arith.addf %0, %2 : vector<8x64xf32>
    %c0_3 = arith.constant 0 : index
    %c0_4 = arith.constant 0 : index
    %4 = vector.load %arg5[%c0_3, %c0_4] : memref<8x64xf32, #tpu.memory_space<vmem>>, vector<8x64xf32>
    tpu.vector_store %arg5[%c0_3, %c0_4], %3 {strides = array<i32>} : memref<8x64xf32, #tpu.memory_space<vmem>>, vector<8x64xf32>,
    return
  }
  func.func @transform_0(%arg0: i32, %arg1: i32) -> i32 {
    %c0_i32 = arith.constant 0 : i32
    %c0_i32_0 = arith.constant 0 : i32
    return %c0_i32 : i32
  }
  func.func @transform_1(%arg0: i32, %arg1: i32) -> (i32, i32) {
    %c0_i32 = arith.constant 0 : i32
    return %arg0, %arg1 : i32, i32
  }
  func.func @transform_2(%arg0: i32, %arg1: i32) -> (i32, i32) {
    %c0_i32 = arith.constant 0 : i32
    %c0_i32_0 = arith.constant 0 : i32
    return %arg0, %c0_i32 : i32, i32
  }
  func.func @transform_3(%arg0: i32, %arg1: i32) -> (i32, i32) {
    %c0_i32 = arith.constant 0 : i32
    return %arg0, %arg1 : i32, i32
  }
}

</mosaic_0001>

<llo_original>
// kernel: tpu_custom_call.1
$region0: #{tpu_custom_call.1}
  #allocation0 [shape = 'u32[]', space=smem, size = 0x4, offset = 0x4, fixed_abs, tag = 'smem constant byte address 0x4 - core index']
  #allocation1 [shape = 'u32[144,128]{1,0:T(1,128)}', space=vmem, size = 0x12000, scoped, tag = 'internal scratch']
  #allocation2 [shape = 's32[1]{0:T(128)S(6)}', space=smem, size = 0x200, scoped, tag = 'scoped memory for tpu_custom_call.1']
  %s0 = inlined_call_operand.<no memory space> [shape: s32[1], index: 0, kind: input, shape index: {}]
  %s1 = inlined_call_operand.vmem [shape: f32[8,64], index: 1, kind: input, shape index: {}]
  %s2 = inlined_call_operand.vmem [shape: f32[64,32], index: 2, kind: input, shape index: {}]
  %s3 = inlined_call_operand.hbm [shape: f32[8,64], index: 3, kind: output, shape index: {}]
  %s4 = sld [smem:[#allocation0]]
  $region22: #{tpu_custom_call.1} parent=0
    _
  %s6 = ssub.s32 1, %s4
  %s7 = scalar_select 0, %s6, %s4
  %8 = sst [smem:[#allocation2]] %s0
  $region1: #{tpu_custom_call.1} parent=0
    #allocation3 [shape = 'u8[4096]{0}', space=vmem, size = 0x1000, scoped, tag = 'output window, operand 0, single buffered']
    #allocation4 [shape = 's32[1]{0}', space=sflag, size = 0x4, scoped, tag = 'scoped memory for tpu_custom_call.1']
    %9 = vsyncpa [#allocation4], 0
    // Predicated region
    $region2: #{tpu_custom_call.1} parent=1 // pred_check
      _
    $region3: #{tpu_custom_call.1} parent=1 // pred_check_branch
      %11 = sbr.rel (0) target = $region5
    $region4: #{tpu_custom_call.1} parent=1 // pred_region
      _
    $region5: #{tpu_custom_call.1} parent=1 // pred_fallthru
      _
    // Predicated region
    $region6: #{tpu_custom_call.1} parent=1 // pred_check
      _
    $region7: #{tpu_custom_call.1} parent=1 // pred_check_branch
      %13 = sbr.rel (0) target = $region9
    $region8: #{tpu_custom_call.1} parent=1 // pred_region
      _
    $region9: #{tpu_custom_call.1} parent=1 // pred_fallthru
      _
    // Predicated region
    $region10: #{tpu_custom_call.1} parent=1 // pred_check
      _
    $region11: #{tpu_custom_call.1} parent=1 // pred_check_branch
      %15 = sbr.rel (0) target = $region13
    $region12: #{tpu_custom_call.1} parent=1 // pred_region
      _
    $region13: #{tpu_custom_call.1} parent=1 // pred_fallthru
      _
    %v16 = vld [vmem:[%s1] sm:$0xff]
    %v17 = vld [vmem:[%s2] sm:$0xff]
    %19 = vrot.lane.b32.xlu0 %v17, 32
    %v20 = vpop.permute.xlu0 %19
    %vm22 = vcmask 261120
    %v23 = vsel %vm22, %v17, %v20
    %v24 = vadd.f32 %v16, %v23
    %vm25 = vcmask 523264
    %26 = vst.msk [vmem:[#allocation3] sm:$0xff] %vm25, %v24
    // Predicated region
    $region14: #{tpu_custom_call.1} parent=1 // pred_check
      _
    $region15: #{tpu_custom_call.1} parent=1 // pred_check_branch
      %28 = sbr.rel (0) target = $region17
    $region16: #{tpu_custom_call.1} parent=1 // pred_region
      %s30 = ssub.s32 128, 128
      %31 = vsyncadd [#allocation4], %s30
      %s33 = sshll.u32 [#allocation3], 4
      %s34 = int_to_ptr.vmem [resolvable:$true] %s33
      %36 = dma.vmem_to_hbm [thread:$0]  %s34, 128, %s3, [#allocation4]
    $region17: #{tpu_custom_call.1} parent=1 // pred_fallthru
      _
    // Predicated region
    $region18: #{tpu_custom_call.1} parent=1 // pred_check
      _
    $region19: #{tpu_custom_call.1} parent=1 // pred_check_branch
      %38 = sbr.rel (0) target = $region21
    $region20: #{tpu_custom_call.1} parent=1 // pred_region
      %39 = dma.done [#allocation4], 128
    $region21: #{tpu_custom_call.1} parent=1 // pred_fallthru
      _
    %40 = vsyncpa [#allocation4], 1

</llo_original>
